<compile_context>
chip_gen: v7x
topology: tpu7x:2x2x1
jax: 0.10.0
libtpu: 0.0.40
codegen_flags: <defaults>
</compile_context>

<pallas_src>
import functools

import jax
import jax.numpy as jnp
from jax import lax
from jax.experimental import pallas as pl
from jax.experimental.pallas import tpu as pltpu


# ---------------------------------------------------------------------------
# Fused Pallas kernel: one image per grid step, channels on sublanes,
# flattened spatial (H*W) on lanes.
# ---------------------------------------------------------------------------
def _fused_bottleneck_kernel(x_ref, w_in_ref, w_dw_ref, w_comb_ref, o_ref, *,
                             c_in, c_bn, c_out, h, w, kh, kw, repeats):
    l = h * w

    # ---- ReLU fused with the load -----------------------------------------
    x = jnp.maximum(x_ref[0], 0.0)                     # (c_in, l) f32

    # ---- 1x1 squeeze conv (c_in -> c_bn) as VPU broadcast-FMAs ------------
    y_rows = []
    for co in range(c_bn):
        row = x[0:1, :] * w_in_ref[0 * c_bn + co]
        for ci in range(1, c_in):
            row = row + x[ci:ci + 1, :] * w_in_ref[ci * c_bn + co]
        y_rows.append(row)
    y = jnp.concatenate(y_rows, axis=0)                # (c_bn, l)

    # ---- precompute W-boundary masks for the depthwise taps ----------------
    lane = lax.broadcasted_iota(jnp.int32, (c_bn, l), 1)
    col = lane % w                                     # column index within a row
    masks = {}
    for dx in range(-(kw // 2), kw // 2 + 1):
        if dx != 0:
            masks[dx] = jnp.logical_and(col + dx >= 0, col + dx < w)

    # ---- `repeats` depthwise KxK convs (groups == channels), stride 1 ------
    halo = (kh // 2) * w + (kw // 2)                   # max |flat shift|
    zpad = jnp.zeros((c_bn, halo), jnp.float32)
    for r in range(repeats):
        ypad = jnp.concatenate([zpad, y, zpad], axis=1)   # in-kernel zero halo
        acc_rows = [jnp.zeros((1, l), jnp.float32) for _ in range(c_bn)]
        for ky in range(kh):
            dy = ky - kh // 2
            for kx in range(kw):
                dx = kx - kw // 2
                s = dy * w + dx
                start = halo + s
                tap = ypad[:, start:start + l]         # tap[:, p] = y[:, p + s]
                if dx != 0:
                    tap = jnp.where(masks[dx], tap, 0.0)
                base = ((r * kh + ky) * kw + kx) * c_bn
                for c in range(c_bn):
                    acc_rows[c] = acc_rows[c] + tap[c:c + 1, :] * w_dw_ref[base + c]
        y = jnp.concatenate(acc_rows, axis=0)          # (c_bn, l)

    # ---- folded 1x1 expand+project conv (c_bn -> c_out) --------------------
    out_rows = []
    for co in range(c_out):
        row = y[0:1, :] * w_comb_ref[0 * c_out + co]
        for ci in range(1, c_bn):
            row = row + y[ci:ci + 1, :] * w_comb_ref[ci * c_out + co]
        out_rows.append(row)
    o_ref[0] = jnp.concatenate(out_rows, axis=0).astype(o_ref.dtype)


def bottleneck2d_forward(x_nchw, params, kernel_size=3):
    N, C_in, H, W = x_nchw.shape
    C_bn = params["pw_in"].shape[1]
    C_out = params["pw_out"].shape[1]
    repeats = len(params["dw"])
    kh = kw = kernel_size
    L = H * W

    # NCHW -> (N, C, H*W): a free reshape (no transpose / data movement).
    x_flat = x_nchw.reshape(N, C_in, L)

    # Tiny weights -> flat f32 vectors read as scalars from SMEM.
    w_in = params["pw_in"].reshape(-1)                                   # (C_in*C_bn,)
    w_dw = jnp.stack(params["dw"], axis=0).reshape(-1)                   # (rep*kh*kw*C_bn,)
    # Fold the two back-to-back 1x1 convs (exact: no nonlinearity, no bias).
    w_comb = (params["pw_expand"] @ params["pw_out"]).reshape(-1)        # (C_bn*C_out,)

    kernel = functools.partial(
        _fused_bottleneck_kernel,
        c_in=C_in, c_bn=C_bn, c_out=C_out, h=H, w=W, kh=kh, kw=kw,
        repeats=repeats)

    y = pl.pallas_call(
        kernel,
        out_shape=jax.ShapeDtypeStruct((N, C_out, L), x_nchw.dtype),
        grid_spec=pltpu.PrefetchScalarGridSpec(
            num_scalar_prefetch=0,
            grid=(N,),
            in_specs=[
                pl.BlockSpec((1, C_in, L), lambda n: (n, 0, 0)),
                pl.BlockSpec(memory_space=pltpu.MemorySpace.SMEM),
                pl.BlockSpec(memory_space=pltpu.MemorySpace.SMEM),
                pl.BlockSpec(memory_space=pltpu.MemorySpace.SMEM),
            ],
            out_specs=pl.BlockSpec((1, C_out, L), lambda n: (n, 0, 0)),
        ),
        compiler_params=pltpu.CompilerParams(
            dimension_semantics=("parallel",)),
    )(x_flat, w_in, w_dw, w_comb)

    return y.reshape(N, C_out, H, W)


# ---------------------------------------------------------------------------
# Parameter init (mirrors the layer stack the PyTorch module builds)
# ---------------------------------------------------------------------------
def init_bottleneck2d(key, in_channels, out_channels, kernel_size=3,
                      bn_depth=2, repeats=1):
    assert bn_depth >= 1 and in_channels // bn_depth >= 1
    kh = kw = kernel_size
    bn_channels = in_channels // bn_depth
    keys = jax.random.split(key, 3 + repeats)

    def _w(k, shape, fan_in):
        return jax.random.normal(k, shape, jnp.float32) / jnp.sqrt(float(fan_in))

    params = {
        # pointwise weights stored as (Cin, Cout), ready for x @ W
        "pw_in": _w(keys[0], (in_channels, bn_channels), in_channels),
        "dw": [
            _w(keys[3 + i], (kh, kw, bn_channels), kh * kw)
            for i in range(repeats)
        ],
        "pw_expand": _w(keys[1], (bn_channels, in_channels), bn_channels),
        "pw_out": _w(keys[2], (in_channels, out_channels), in_channels),
    }
    return params


# ---------------------------------------------------------------------------
# Pure-JAX reference (mirrors the PyTorch nn.Sequential exactly, unfused)
# ---------------------------------------------------------------------------
def reference_forward(x_nchw, params, kernel_size=3):
    pad = kernel_size // 2

    def conv1x1(x, w_cin_cout):
        w = jnp.transpose(w_cin_cout, (1, 0))[:, :, None, None]  # OIHW
        return lax.conv_general_dilated(
            x, w, (1, 1), ((0, 0), (0, 0)),
            dimension_numbers=("NCHW", "OIHW", "NCHW"))

    y = jnp.maximum(x_nchw, 0.0)
    y = conv1x1(y, params["pw_in"])
    for w_dw in params["dw"]:
        Cg = y.shape[1]
        w = jnp.transpose(w_dw, (2, 0, 1))[:, None, :, :]  # (C, 1, kh, kw)
        y = lax.conv_general_dilated(
            y, w, (1, 1), ((pad, pad), (pad, pad)),
            dimension_numbers=("NCHW", "OIHW", "NCHW"),
            feature_group_count=Cg)
    y = conv1x1(y, params["pw_expand"])
    y = conv1x1(y, params["pw_out"])
    return y


if __name__ == "__main__":
    key = jax.random.PRNGKey(0)
    k_x, k_p = jax.random.split(key)

    N, C_IN, H, W = 2, 4, 16, 16
    C_OUT, KSIZE, BN_DEPTH, REPEATS = 4, 3, 2, 1

    x = jax.random.normal(k_x, (N, C_IN, H, W), jnp.float32)
    params = init_bottleneck2d(k_p, C_IN, C_OUT, kernel_size=KSIZE,
                               bn_depth=BN_DEPTH, repeats=REPEATS)

    y = bottleneck2d_forward(x, params, kernel_size=KSIZE)
    y = jax.block_until_ready(y)

    y_ref = reference_forward(x, params, kernel_size=KSIZE)
    assert y.shape == (N, C_OUT, H, W)
    assert jnp.allclose(y, y_ref, atol=1e-4, rtol=1e-4), (
        f"max abs err = {jnp.max(jnp.abs(y - y_ref))}")

    print("KERNEL_OK")
</pallas_src>

<mosaic_0001>
module attributes {stable_mosaic.version = 11 : i64} {
  func.func @_fused_bottleneck_kernel(%arg0: i32, %arg1: memref<1x4x256xf32, #tpu.memory_space<vmem>>, %arg2: memref<8xf32, #tpu.memory_space<smem>>, %arg3: memref<18xf32, #tpu.memory_space<smem>>, %arg4: memref<8xf32, #tpu.memory_space<smem>>, %arg5: memref<1x4x256xf32, #tpu.memory_space<vmem>>) attributes {dimension_semantics = [#tpu.dimension_semantics<parallel>], iteration_bounds = array<i64: 2>, scalar_prefetch = 0 : i64, scratch_operands = 0 : i64, tpu.core_type = #tpu.core_type<tc>, window_params = [{transform_indices = @transform_0, window_bounds = array<i64: 1, 4, 256>}, {transform_indices = @transform_1, window_bounds = array<i64: 8>}, {transform_indices = @transform_2, window_bounds = array<i64: 18>}, {transform_indices = @transform_3, window_bounds = array<i64: 8>}, {transform_indices = @transform_4, window_bounds = array<i64: 1, 4, 256>}]} {
    %c0 = arith.constant 0 : index
    %c0_0 = arith.constant 0 : index
    %c0_1 = arith.constant 0 : index
    %0 = vector.load %arg1[%c0, %c0_0, %c0_1] : memref<1x4x256xf32, #tpu.memory_space<vmem>>, vector<1x4x256xf32>
    %1 = vector.shape_cast %0 : vector<1x4x256xf32> to vector<4x256xf32>
    %cst = arith.constant 0.000000e+00 : f32
    %2 = vector.broadcast %cst : f32 to vector<4x256xf32>
    %3 = arith.maximumf %1, %2 : vector<4x256xf32>
    %4 = vector.extract_strided_slice %3 {offsets = [0, 0], sizes = [1, 256], strides = [1, 1]} : vector<4x256xf32> to vector<1x256xf32>
    %c0_2 = arith.constant 0 : index
    %5 = memref.load %arg2[%c0_2] : memref<8xf32, #tpu.memory_space<smem>>
    %6 = vector.broadcast %5 : f32 to vector<1x256xf32>
    %7 = arith.mulf %4, %6 : vector<1x256xf32>
    %8 = vector.extract_strided_slice %3 {offsets = [1, 0], sizes = [1, 256], strides = [1, 1]} : vector<4x256xf32> to vector<1x256xf32>
    %c2 = arith.constant 2 : index
    %9 = memref.load %arg2[%c2] : memref<8xf32, #tpu.memory_space<smem>>
    %10 = vector.broadcast %9 : f32 to vector<1x256xf32>
    %11 = arith.mulf %8, %10 : vector<1x256xf32>
    %12 = arith.addf %7, %11 : vector<1x256xf32>
    %13 = vector.extract_strided_slice %3 {offsets = [2, 0], sizes = [1, 256], strides = [1, 1]} : vector<4x256xf32> to vector<1x256xf32>
    %c4 = arith.constant 4 : index
    %14 = memref.load %arg2[%c4] : memref<8xf32, #tpu.memory_space<smem>>
    %15 = vector.broadcast %14 : f32 to vector<1x256xf32>
    %16 = arith.mulf %13, %15 : vector<1x256xf32>
    %17 = arith.addf %12, %16 : vector<1x256xf32>
    %18 = vector.extract_strided_slice %3 {offsets = [3, 0], sizes = [1, 256], strides = [1, 1]} : vector<4x256xf32> to vector<1x256xf32>
    %c6 = arith.constant 6 : index
    %19 = memref.load %arg2[%c6] : memref<8xf32, #tpu.memory_space<smem>>
    %20 = vector.broadcast %19 : f32 to vector<1x256xf32>
    %21 = arith.mulf %18, %20 : vector<1x256xf32>
    %22 = arith.addf %17, %21 : vector<1x256xf32>
    %23 = vector.extract_strided_slice %3 {offsets = [0, 0], sizes = [1, 256], strides = [1, 1]} : vector<4x256xf32> to vector<1x256xf32>
    %c1 = arith.constant 1 : index
    %24 = memref.load %arg2[%c1] : memref<8xf32, #tpu.memory_space<smem>>
    %25 = vector.broadcast %24 : f32 to vector<1x256xf32>
    %26 = arith.mulf %23, %25 : vector<1x256xf32>
    %27 = vector.extract_strided_slice %3 {offsets = [1, 0], sizes = [1, 256], strides = [1, 1]} : vector<4x256xf32> to vector<1x256xf32>
    %c3 = arith.constant 3 : index
    %28 = memref.load %arg2[%c3] : memref<8xf32, #tpu.memory_space<smem>>
    %29 = vector.broadcast %28 : f32 to vector<1x256xf32>
    %30 = arith.mulf %27, %29 : vector<1x256xf32>
    %31 = arith.addf %26, %30 : vector<1x256xf32>
    %32 = vector.extract_strided_slice %3 {offsets = [2, 0], sizes = [1, 256], strides = [1, 1]} : vector<4x256xf32> to vector<1x256xf32>
    %c5 = arith.constant 5 : index
    %33 = memref.load %arg2[%c5] : memref<8xf32, #tpu.memory_space<smem>>
    %34 = vector.broadcast %33 : f32 to vector<1x256xf32>
    %35 = arith.mulf %32, %34 : vector<1x256xf32>
    %36 = arith.addf %31, %35 : vector<1x256xf32>
    %37 = vector.extract_strided_slice %3 {offsets = [3, 0], sizes = [1, 256], strides = [1, 1]} : vector<4x256xf32> to vector<1x256xf32>
    %c7 = arith.constant 7 : index
    %38 = memref.load %arg2[%c7] : memref<8xf32, #tpu.memory_space<smem>>
    %39 = vector.broadcast %38 : f32 to vector<1x256xf32>
    %40 = arith.mulf %37, %39 : vector<1x256xf32>
    %41 = arith.addf %36, %40 : vector<1x256xf32>
    %42 = tpu.concatenate %22, %41 in 0 : vector<1x256xf32>, vector<1x256xf32> -> vector<2x256xf32>
    %43 = tpu.iota {dimensions = array<i32: 1>} : vector<2x256xi32>
    %c16_i32 = arith.constant 16 : i32
    %c0_i32 = arith.constant 0 : i32
    %44 = arith.cmpi eq, %c16_i32, %c0_i32 : i32
    %c1_i32 = arith.constant 1 : i32
    %45 = arith.select %44, %c1_i32, %c16_i32 : i32
    %46 = vector.broadcast %45 : i32 to vector<2x256xi32>
    %47 = arith.remsi %43, %46 : vector<2x256xi32>
    %c0_i32_3 = arith.constant 0 : i32
    %48 = vector.broadcast %c0_i32_3 : i32 to vector<2x256xi32>
    %49 = arith.cmpi ne, %47, %48 : vector<2x256xi32>
    %c0_i32_4 = arith.constant 0 : i32
    %50 = vector.broadcast %c0_i32_4 : i32 to vector<2x256xi32>
    %51 = arith.cmpi slt, %47, %50 : vector<2x256xi32>
    %c0_i32_5 = arith.constant 0 : i32
    %52 = arith.cmpi slt, %45, %c0_i32_5 : i32
    %53 = vector.broadcast %52 : i1 to vector<2x256xi1>
    %54 = vector.broadcast %53 : vector<2x256xi1> to vector<2x256xi1>
    %55 = arith.xori %51, %54 : vector<2x256xi1>
    %56 = arith.andi %55, %49 : vector<2x256xi1>
    %57 = vector.broadcast %45 : i32 to vector<2x256xi32>
    %58 = arith.addi %47, %57 : vector<2x256xi32>
    %59 = arith.select %56, %58, %47 : vector<2x256xi1>, vector<2x256xi32>
    %c-1_i32 = arith.constant -1 : i32
    %60 = vector.broadcast %c-1_i32 : i32 to vector<2x256xi32>
    %61 = arith.addi %59, %60 : vector<2x256xi32>
    %c0_i32_6 = arith.constant 0 : i32
    %62 = vector.broadcast %c0_i32_6 : i32 to vector<2x256xi32>
    %63 = arith.cmpi sge, %61, %62 : vector<2x256xi32>
    %c-1_i32_7 = arith.constant -1 : i32
    %64 = vector.broadcast %c-1_i32_7 : i32 to vector<2x256xi32>
    %65 = arith.addi %59, %64 : vector<2x256xi32>
    %c16_i32_8 = arith.constant 16 : i32
    %66 = vector.broadcast %c16_i32_8 : i32 to vector<2x256xi32>
    %67 = arith.cmpi slt, %65, %66 : vector<2x256xi32>
    %68 = arith.andi %63, %67 : vector<2x256xi1>
    %c1_i32_9 = arith.constant 1 : i32
    %69 = vector.broadcast %c1_i32_9 : i32 to vector<2x256xi32>
    %70 = arith.addi %59, %69 : vector<2x256xi32>
    %c0_i32_10 = arith.constant 0 : i32
    %71 = vector.broadcast %c0_i32_10 : i32 to vector<2x256xi32>
    %72 = arith.cmpi sge, %70, %71 : vector<2x256xi32>
    %c1_i32_11 = arith.constant 1 : i32
    %73 = vector.broadcast %c1_i32_11 : i32 to vector<2x256xi32>
    %74 = arith.addi %59, %73 : vector<2x256xi32>
    %c16_i32_12 = arith.constant 16 : i32
    %75 = vector.broadcast %c16_i32_12 : i32 to vector<2x256xi32>
    %76 = arith.cmpi slt, %74, %75 : vector<2x256xi32>
    %77 = arith.andi %72, %76 : vector<2x256xi1>
    %cst_13 = arith.constant 0.000000e+00 : f32
    %78 = vector.broadcast %cst_13 : f32 to vector<2x17xf32>
    %79 = tpu.concatenate %78, %42, %78 in 1 : vector<2x17xf32>, vector<2x256xf32>, vector<2x17xf32> -> vector<2x290xf32>
    %cst_14 = arith.constant 0.000000e+00 : f32
    %80 = vector.broadcast %cst_14 : f32 to vector<1x256xf32>
    %cst_15 = arith.constant 0.000000e+00 : f32
    %81 = vector.broadcast %cst_15 : f32 to vector<1x256xf32>
    %82 = vector.extract_strided_slice %79 {offsets = [0, 0], sizes = [2, 256], strides = [1, 1]} : vector<2x290xf32> to vector<2x256xf32>
    %cst_16 = arith.constant 0.000000e+00 : f32
    %83 = vector.broadcast %cst_16 : f32 to vector<2x256xf32>
    %84 = arith.select %68, %82, %83 : vector<2x256xi1>, vector<2x256xf32>
    %85 = vector.extract_strided_slice %84 {offsets = [0, 0], sizes = [1, 256], strides = [1, 1]} : vector<2x256xf32> to vector<1x256xf32>
    %c0_17 = arith.constant 0 : index
    %86 = memref.load %arg3[%c0_17] : memref<18xf32, #tpu.memory_space<smem>>
    %87 = vector.broadcast %86 : f32 to vector<1x256xf32>
    %88 = arith.mulf %85, %87 : vector<1x256xf32>
    %89 = arith.addf %80, %88 : vector<1x256xf32>
    %90 = vector.extract_strided_slice %84 {offsets = [1, 0], sizes = [1, 256], strides = [1, 1]} : vector<2x256xf32> to vector<1x256xf32>
    %c1_18 = arith.constant 1 : index
    %91 = memref.load %arg3[%c1_18] : memref<18xf32, #tpu.memory_space<smem>>
    %92 = vector.broadcast %91 : f32 to vector<1x256xf32>
    %93 = arith.mulf %90, %92 : vector<1x256xf32>
    %94 = arith.addf %81, %93 : vector<1x256xf32>
    %95 = vector.extract_strided_slice %79 {offsets = [0, 1], sizes = [2, 256], strides = [1, 1]} : vector<2x290xf32> to vector<2x256xf32>
    %96 = vector.extract_strided_slice %95 {offsets = [0, 0], sizes = [1, 256], strides = [1, 1]} : vector<2x256xf32> to vector<1x256xf32>
    %c2_19 = arith.constant 2 : index
    %97 = memref.load %arg3[%c2_19] : memref<18xf32, #tpu.memory_space<smem>>
    %98 = vector.broadcast %97 : f32 to vector<1x256xf32>
    %99 = arith.mulf %96, %98 : vector<1x256xf32>
    %100 = arith.addf %89, %99 : vector<1x256xf32>
    %101 = vector.extract_strided_slice %95 {offsets = [1, 0], sizes = [1, 256], strides = [1, 1]} : vector<2x256xf32> to vector<1x256xf32>
    %c3_20 = arith.constant 3 : index
    %102 = memref.load %arg3[%c3_20] : memref<18xf32, #tpu.memory_space<smem>>
    %103 = vector.broadcast %102 : f32 to vector<1x256xf32>
    %104 = arith.mulf %101, %103 : vector<1x256xf32>
    %105 = arith.addf %94, %104 : vector<1x256xf32>
    %106 = vector.extract_strided_slice %79 {offsets = [0, 2], sizes = [2, 256], strides = [1, 1]} : vector<2x290xf32> to vector<2x256xf32>
    %cst_21 = arith.constant 0.000000e+00 : f32
    %107 = vector.broadcast %cst_21 : f32 to vector<2x256xf32>
    %108 = arith.select %77, %106, %107 : vector<2x256xi1>, vector<2x256xf32>
    %109 = vector.extract_strided_slice %108 {offsets = [0, 0], sizes = [1, 256], strides = [1, 1]} : vector<2x256xf32> to vector<1x256xf32>
    %c4_22 = arith.constant 4 : index
    %110 = memref.load %arg3[%c4_22] : memref<18xf32, #tpu.memory_space<smem>>
    %111 = vector.broadcast %110 : f32 to vector<1x256xf32>
    %112 = arith.mulf %109, %111 : vector<1x256xf32>
    %113 = arith.addf %100, %112 : vector<1x256xf32>
    %114 = vector.extract_strided_slice %108 {offsets = [1, 0], sizes = [1, 256], strides = [1, 1]} : vector<2x256xf32> to vector<1x256xf32>
    %c5_23 = arith.constant 5 : index
    %115 = memref.load %arg3[%c5_23] : memref<18xf32, #tpu.memory_space<smem>>
    %116 = vector.broadcast %115 : f32 to vector<1x256xf32>
    %117 = arith.mulf %114, %116 : vector<1x256xf32>
    %118 = arith.addf %105, %117 : vector<1x256xf32>
    %119 = vector.extract_strided_slice %79 {offsets = [0, 16], sizes = [2, 256], strides = [1, 1]} : vector<2x290xf32> to vector<2x256xf32>
    %cst_24 = arith.constant 0.000000e+00 : f32
    %120 = vector.broadcast %cst_24 : f32 to vector<2x256xf32>
    %121 = arith.select %68, %119, %120 : vector<2x256xi1>, vector<2x256xf32>
    %122 = vector.extract_strided_slice %121 {offsets = [0, 0], sizes = [1, 256], strides = [1, 1]} : vector<2x256xf32> to vector<1x256xf32>
    %c6_25 = arith.constant 6 : index
    %123 = memref.load %arg3[%c6_25] : memref<18xf32, #tpu.memory_space<smem>>
    %124 = vector.broadcast %123 : f32 to vector<1x256xf32>
    %125 = arith.mulf %122, %124 : vector<1x256xf32>
    %126 = arith.addf %113, %125 : vector<1x256xf32>
    %127 = vector.extract_strided_slice %121 {offsets = [1, 0], sizes = [1, 256], strides = [1, 1]} : vector<2x256xf32> to vector<1x256xf32>
    %c7_26 = arith.constant 7 : index
    %128 = memref.load %arg3[%c7_26] : memref<18xf32, #tpu.memory_space<smem>>
    %129 = vector.broadcast %128 : f32 to vector<1x256xf32>
    %130 = arith.mulf %127, %129 : vector<1x256xf32>
    %131 = arith.addf %118, %130 : vector<1x256xf32>
    %132 = vector.extract_strided_slice %79 {offsets = [0, 17], sizes = [2, 256], strides = [1, 1]} : vector<2x290xf32> to vector<2x256xf32>
    %133 = vector.extract_strided_slice %132 {offsets = [0, 0], sizes = [1, 256], strides = [1, 1]} : vector<2x256xf32> to vector<1x256xf32>
    %c8 = arith.constant 8 : index
    %134 = memref.load %arg3[%c8] : memref<18xf32, #tpu.memory_space<smem>>
    %135 = vector.broadcast %134 : f32 to vector<1x256xf32>
    %136 = arith.mulf %133, %135 : vector<1x256xf32>
    %137 = arith.addf %126, %136 : vector<1x256xf32>
    %138 = vector.extract_strided_slice %132 {offsets = [1, 0], sizes = [1, 256], strides = [1, 1]} : vector<2x256xf32> to vector<1x256xf32>
    %c9 = arith.constant 9 : index
    %139 = memref.load %arg3[%c9] : memref<18xf32, #tpu.memory_space<smem>>
    %140 = vector.broadcast %139 : f32 to vector<1x256xf32>
    %141 = arith.mulf %138, %140 : vector<1x256xf32>
    %142 = arith.addf %131, %141 : vector<1x256xf32>
    %143 = vector.extract_strided_slice %79 {offsets = [0, 18], sizes = [2, 256], strides = [1, 1]} : vector<2x290xf32> to vector<2x256xf32>
    %cst_27 = arith.constant 0.000000e+00 : f32
    %144 = vector.broadcast %cst_27 : f32 to vector<2x256xf32>
    %145 = arith.select %77, %143, %144 : vector<2x256xi1>, vector<2x256xf32>
    %146 = vector.extract_strided_slice %145 {offsets = [0, 0], sizes = [1, 256], strides = [1, 1]} : vector<2x256xf32> to vector<1x256xf32>
    %c10 = arith.constant 10 : index
    %147 = memref.load %arg3[%c10] : memref<18xf32, #tpu.memory_space<smem>>
    %148 = vector.broadcast %147 : f32 to vector<1x256xf32>
    %149 = arith.mulf %146, %148 : vector<1x256xf32>
    %150 = arith.addf %137, %149 : vector<1x256xf32>
    %151 = vector.extract_strided_slice %145 {offsets = [1, 0], sizes = [1, 256], strides = [1, 1]} : vector<2x256xf32> to vector<1x256xf32>
    %c11 = arith.constant 11 : index
    %152 = memref.load %arg3[%c11] : memref<18xf32, #tpu.memory_space<smem>>
    %153 = vector.broadcast %152 : f32 to vector<1x256xf32>
    %154 = arith.mulf %151, %153 : vector<1x256xf32>
    %155 = arith.addf %142, %154 : vector<1x256xf32>
    %156 = vector.extract_strided_slice %79 {offsets = [0, 32], sizes = [2, 256], strides = [1, 1]} : vector<2x290xf32> to vector<2x256xf32>
    %cst_28 = arith.constant 0.000000e+00 : f32
    %157 = vector.broadcast %cst_28 : f32 to vector<2x256xf32>
    %158 = arith.select %68, %156, %157 : vector<2x256xi1>, vector<2x256xf32>
    %159 = vector.extract_strided_slice %158 {offsets = [0, 0], sizes = [1, 256], strides = [1, 1]} : vector<2x256xf32> to vector<1x256xf32>
    %c12 = arith.constant 12 : index
    %160 = memref.load %arg3[%c12] : memref<18xf32, #tpu.memory_space<smem>>
    %161 = vector.broadcast %160 : f32 to vector<1x256xf32>
    %162 = arith.mulf %159, %161 : vector<1x256xf32>
    %163 = arith.addf %150, %162 : vector<1x256xf32>
    %164 = vector.extract_strided_slice %158 {offsets = [1, 0], sizes = [1, 256], strides = [1, 1]} : vector<2x256xf32> to vector<1x256xf32>
    %c13 = arith.constant 13 : index
    %165 = memref.load %arg3[%c13] : memref<18xf32, #tpu.memory_space<smem>>
    %166 = vector.broadcast %165 : f32 to vector<1x256xf32>
    %167 = arith.mulf %164, %166 : vector<1x256xf32>
    %168 = arith.addf %155, %167 : vector<1x256xf32>
    %169 = vector.extract_strided_slice %79 {offsets = [0, 33], sizes = [2, 256], strides = [1, 1]} : vector<2x290xf32> to vector<2x256xf32>
    %170 = vector.extract_strided_slice %169 {offsets = [0, 0], sizes = [1, 256], strides = [1, 1]} : vector<2x256xf32> to vector<1x256xf32>
    %c14 = arith.constant 14 : index
    %171 = memref.load %arg3[%c14] : memref<18xf32, #tpu.memory_space<smem>>
    %172 = vector.broadcast %171 : f32 to vector<1x256xf32>
    %173 = arith.mulf %170, %172 : vector<1x256xf32>
    %174 = arith.addf %163, %173 : vector<1x256xf32>
    %175 = vector.extract_strided_slice %169 {offsets = [1, 0], sizes = [1, 256], strides = [1, 1]} : vector<2x256xf32> to vector<1x256xf32>
    %c15 = arith.constant 15 : index
    %176 = memref.load %arg3[%c15] : memref<18xf32, #tpu.memory_space<smem>>
    %177 = vector.broadcast %176 : f32 to vector<1x256xf32>
    %178 = arith.mulf %175, %177 : vector<1x256xf32>
    %179 = arith.addf %168, %178 : vector<1x256xf32>
    %180 = vector.extract_strided_slice %79 {offsets = [0, 34], sizes = [2, 256], strides = [1, 1]} : vector<2x290xf32> to vector<2x256xf32>
    %cst_29 = arith.constant 0.000000e+00 : f32
    %181 = vector.broadcast %cst_29 : f32 to vector<2x256xf32>
    %182 = arith.select %77, %180, %181 : vector<2x256xi1>, vector<2x256xf32>
    %183 = vector.extract_strided_slice %182 {offsets = [0, 0], sizes = [1, 256], strides = [1, 1]} : vector<2x256xf32> to vector<1x256xf32>
    %c16 = arith.constant 16 : index
    %184 = memref.load %arg3[%c16] : memref<18xf32, #tpu.memory_space<smem>>
    %185 = vector.broadcast %184 : f32 to vector<1x256xf32>
    %186 = arith.mulf %183, %185 : vector<1x256xf32>
    %187 = arith.addf %174, %186 : vector<1x256xf32>
    %188 = vector.extract_strided_slice %182 {offsets = [1, 0], sizes = [1, 256], strides = [1, 1]} : vector<2x256xf32> to vector<1x256xf32>
    %c17 = arith.constant 17 : index
    %189 = memref.load %arg3[%c17] : memref<18xf32, #tpu.memory_space<smem>>
    %190 = vector.broadcast %189 : f32 to vector<1x256xf32>
    %191 = arith.mulf %188, %190 : vector<1x256xf32>
    %192 = arith.addf %179, %191 : vector<1x256xf32>
    %193 = tpu.concatenate %187, %192 in 0 : vector<1x256xf32>, vector<1x256xf32> -> vector<2x256xf32>
    %194 = vector.extract_strided_slice %193 {offsets = [0, 0], sizes = [1, 256], strides = [1, 1]} : vector<2x256xf32> to vector<1x256xf32>
    %c0_30 = arith.constant 0 : index
    %195 = memref.load %arg4[%c0_30] : memref<8xf32, #tpu.memory_space<smem>>
    %196 = vector.broadcast %195 : f32 to vector<1x256xf32>
    %197 = arith.mulf %194, %196 : vector<1x256xf32>
    %198 = vector.extract_strided_slice %193 {offsets = [1, 0], sizes = [1, 256], strides = [1, 1]} : vector<2x256xf32> to vector<1x256xf32>
    %c4_31 = arith.constant 4 : index
    %199 = memref.load %arg4[%c4_31] : memref<8xf32, #tpu.memory_space<smem>>
    %200 = vector.broadcast %199 : f32 to vector<1x256xf32>
    %201 = arith.mulf %198, %200 : vector<1x256xf32>
    %202 = arith.addf %197, %201 : vector<1x256xf32>
    %203 = vector.extract_strided_slice %193 {offsets = [0, 0], sizes = [1, 256], strides = [1, 1]} : vector<2x256xf32> to vector<1x256xf32>
    %c1_32 = arith.constant 1 : index
    %204 = memref.load %arg4[%c1_32] : memref<8xf32, #tpu.memory_space<smem>>
    %205 = vector.broadcast %204 : f32 to vector<1x256xf32>
    %206 = arith.mulf %203, %205 : vector<1x256xf32>
    %207 = vector.extract_strided_slice %193 {offsets = [1, 0], sizes = [1, 256], strides = [1, 1]} : vector<2x256xf32> to vector<1x256xf32>
    %c5_33 = arith.constant 5 : index
    %208 = memref.load %arg4[%c5_33] : memref<8xf32, #tpu.memory_space<smem>>
    %209 = vector.broadcast %208 : f32 to vector<1x256xf32>
    %210 = arith.mulf %207, %209 : vector<1x256xf32>
    %211 = arith.addf %206, %210 : vector<1x256xf32>
    %212 = vector.extract_strided_slice %193 {offsets = [0, 0], sizes = [1, 256], strides = [1, 1]} : vector<2x256xf32> to vector<1x256xf32>
    %c2_34 = arith.constant 2 : index
    %213 = memref.load %arg4[%c2_34] : memref<8xf32, #tpu.memory_space<smem>>
    %214 = vector.broadcast %213 : f32 to vector<1x256xf32>
    %215 = arith.mulf %212, %214 : vector<1x256xf32>
    %216 = vector.extract_strided_slice %193 {offsets = [1, 0], sizes = [1, 256], strides = [1, 1]} : vector<2x256xf32> to vector<1x256xf32>
    %c6_35 = arith.constant 6 : index
    %217 = memref.load %arg4[%c6_35] : memref<8xf32, #tpu.memory_space<smem>>
    %218 = vector.broadcast %217 : f32 to vector<1x256xf32>
    %219 = arith.mulf %216, %218 : vector<1x256xf32>
    %220 = arith.addf %215, %219 : vector<1x256xf32>
    %221 = vector.extract_strided_slice %193 {offsets = [0, 0], sizes = [1, 256], strides = [1, 1]} : vector<2x256xf32> to vector<1x256xf32>
    %c3_36 = arith.constant 3 : index
    %222 = memref.load %arg4[%c3_36] : memref<8xf32, #tpu.memory_space<smem>>
    %223 = vector.broadcast %222 : f32 to vector<1x256xf32>
    %224 = arith.mulf %221, %223 : vector<1x256xf32>
    %225 = vector.extract_strided_slice %193 {offsets = [1, 0], sizes = [1, 256], strides = [1, 1]} : vector<2x256xf32> to vector<1x256xf32>
    %c7_37 = arith.constant 7 : index
    %226 = memref.load %arg4[%c7_37] : memref<8xf32, #tpu.memory_space<smem>>
    %227 = vector.broadcast %226 : f32 to vector<1x256xf32>
    %228 = arith.mulf %225, %227 : vector<1x256xf32>
    %229 = arith.addf %224, %228 : vector<1x256xf32>
    %230 = tpu.concatenate %202, %211, %220, %229 in 0 : vector<1x256xf32>, vector<1x256xf32>, vector<1x256xf32>, vector<1x256xf32> -> vector<4x256xf32>
    %c0_38 = arith.constant 0 : index
    %c0_39 = arith.constant 0 : index
    %c0_40 = arith.constant 0 : index
    %231 = vector.load %arg5[%c0_38, %c0_39, %c0_40] : memref<1x4x256xf32, #tpu.memory_space<vmem>>, vector<1x4x256xf32>
    %232 = vector.shape_cast %231 : vector<1x4x256xf32> to vector<4x256xf32>
    %233 = vector.shape_cast %230 : vector<4x256xf32> to vector<1x4x256xf32>
    tpu.vector_store %arg5[%c0_38, %c0_39, %c0_40], %233 {strides = array<i32>} : memref<1x4x256xf32, #tpu.memory_space<vmem>>, vector<1x4x256xf32>,
    return
  }
  func.func @transform_0(%arg0: i32) -> (i32, i32, i32) {
    %c0_i32 = arith.constant 0 : i32
    %c0_i32_0 = arith.constant 0 : i32
    %c0_i32_1 = arith.constant 0 : i32
    return %arg0, %c0_i32, %c0_i32_0 : i32, i32, i32
  }
  func.func @transform_1(%arg0: i32) -> i32 {
    %c0_i32 = arith.constant 0 : i32
    %c0_i32_0 = arith.constant 0 : i32
    return %c0_i32 : i32
  }
  func.func @transform_2(%arg0: i32) -> i32 {
    %c0_i32 = arith.constant 0 : i32
    %c0_i32_0 = arith.constant 0 : i32
    return %c0_i32 : i32
  }
  func.func @transform_3(%arg0: i32) -> i32 {
    %c0_i32 = arith.constant 0 : i32
    %c0_i32_0 = arith.constant 0 : i32
    return %c0_i32 : i32
  }
  func.func @transform_4(%arg0: i32) -> (i32, i32, i32) {
    %c0_i32 = arith.constant 0 : i32
    %c0_i32_0 = arith.constant 0 : i32
    %c0_i32_1 = arith.constant 0 : i32
    return %arg0, %c0_i32, %c0_i32_0 : i32, i32, i32
  }
}

</mosaic_0001>

<llo_original>
// kernel: tpu_custom_call.1
$region0: #{tpu_custom_call.1}
  #allocation0 [shape = 'u32[]', space=smem, size = 0x4, offset = 0x4, fixed_abs, tag = 'smem constant byte address 0x4 - core index']
  #allocation1 [shape = 'u32[144,128]{1,0:T(1,128)}', space=vmem, size = 0x12000, scoped, tag = 'internal scratch']
  %s0 = inlined_call_operand.hbm [shape: f32[2,4,256], index: 0, kind: input, shape index: {}]
  %s1 = inlined_call_operand.vmem [shape: f32[8], index: 1, kind: input, shape index: {}]
  %s2 = inlined_call_operand.vmem [shape: f32[18], index: 2, kind: input, shape index: {}]
  %s3 = inlined_call_operand.vmem [shape: f32[8], index: 3, kind: input, shape index: {}]
  %s4 = inlined_call_operand.hbm [shape: f32[2,4,256], index: 4, kind: output, shape index: {}]
  %s5 = sld [smem:[#allocation0]]
  $region65: #{tpu_custom_call.1} parent=0
    _
  %s7 = ssub.s32 1, %s5
  %s8 = scalar_select 0, %s7, %s5
  $region1: #{tpu_custom_call.1} parent=0
    #allocation2 [shape = 'u8[8192]{0}', space=vmem, size = 0x2000, scoped, tag = 'input window, operand 0']
    #allocation3 [shape = 's32[2]{0}', space=sflag, size = 0x8, scoped, tag = 'scoped memory for tpu_custom_call.1']
    #allocation4 [shape = 's32[2]{0}', space=sflag, size = 0x8, scoped, tag = 'scoped memory for tpu_custom_call.1']
    #allocation5 [shape = 's32[2]{0}', space=sflag, size = 0x8, scoped, tag = 'scoped memory for tpu_custom_call.1']
    #allocation6 [shape = 'u8[512]{0}', space=smem, size = 0x200, scoped, tag = 'input window, operand 1, single buffered']
    #allocation7 [shape = 'u8[512]{0}', space=smem, size = 0x200, scoped, tag = 'input window, operand 2, single buffered']
    #allocation8 [shape = 's32[1]{0}', space=sflag, size = 0x4, scoped, tag = 'scoped memory for tpu_custom_call.1']
    #allocation9 [shape = 'u8[512]{0}', space=smem, size = 0x200, scoped, tag = 'input window, operand 3, single buffered']
    #allocation10 [shape = 'u8[8192]{0}', space=vmem, size = 0x2000, scoped, tag = 'output window, operand 0']
    %9 = vsyncpa [#allocation3], 0
    %s10 = scalar_lea.sflag [#allocation3], 1
    %11 = vsyncpa %s10, 0
    %12 = vsyncpa [#allocation5], 0
    %13 = vsyncpa [#allocation8], 0
    %14 = vsyncpa [#allocation4], 0
    %s15 = scalar_lea.sflag [#allocation4], 1
    %16 = vsyncpa %s15, 0
    loop: start=0, step=1, limit=4
    $region2: #{tpu_custom_call.1} parent=1 // loop_pre_header
      _
    $region3: #{tpu_custom_call.1} parent=1 // loop_header
      %s18 = sphi 0, %s22
      %p19 = scmp.ge.s32.totalorder %s18, 4
      %s28 = sphi 0, %s30
      %s31 = sphi 0, %s28
      %s32 = sphi 0, %s31
      %s48 = sphi 0, %s32
      %s52 = sphi 0, %s52
      %s54 = sphi 0, %s52
      %s55 = sphi 0, %s54
      %s69 = sphi 0, %s55
      %s73 = sphi 0, %s73
      %s75 = sphi 0, %s73
      %s76 = sphi 0, %s75
      %s90 = sphi 0, %s76
      %s94 = sphi 0, %s94
      %s96 = sphi 0, %s94
      %s97 = sphi 0, %s96
      %s111 = sphi 0, %s97
      %s117 = sphi 0, %s119
      %s120 = sphi 0, %s117
      %s121 = sphi 0, %s120
      %s137 = sphi 0, %s121
    $region4: #{tpu_custom_call.1} parent=1 // loop_header_branch
      %21 = sbr.rel (%p19) target = $region8
    $region5: #{tpu_custom_call.1} parent=1 // loop_body
      %s23 = ssub.s32 %s18, 1
      %s24 = ssub.s32 %s18, 2
      %s25 = sadd.s32 %s18, 1
      %s26 = ssub.s32 %s18, %s25
      %p27 = scmp.eq.s32.totalorder %s26, 0
      %s29 = sadd.s32 %s28, 1
      %s30 = scalar_select %p27, %s28, %s29
      %p33 = pneg %p27
      %p34 = scmp.eq.s32.totalorder %s18, 1
      %p35 = por %p33, %p34
      %p36 = scmp.ne.s32.totalorder %s28, %s31
      %p37 = scmp.eq.s32.totalorder %s18, 0
      %p38 = por %p36, %p37
      %p39 = scmp.ne.s32.totalorder %s28, %s31
      %p40 = scmp.eq.s32.totalorder %s23, 1
      %p41 = por %p39, %p40
      %p42 = scmp.ne.s32.totalorder %s31, %s32
      %p43 = scmp.eq.s32.totalorder %s23, 0
      %p44 = por %p42, %p43
      %p45 = scmp.ne.s32.totalorder %s31, %s32
      %p46 = scmp.eq.s32.totalorder %s24, 1
      %p47 = por %p45, %p46
      %p49 = scmp.ne.s32.totalorder %s32, %s48
      %p50 = scmp.eq.s32.totalorder %s24, 0
      %p51 = por %p49, %p50
      %s53 = sadd.s32 %s52, 1
      %p56 = scmp.eq.s32.totalorder %s18, 1
      %p57 = scmp.ne.s32.totalorder %s52, %s54
      %p58 = scmp.eq.s32.totalorder %s18, 0
      %p59 = por %p57, %p58
      %p60 = scmp.ne.s32.totalorder %s52, %s54
      %p61 = scmp.eq.s32.totalorder %s23, 1
      %p62 = por %p60, %p61
      %p63 = scmp.ne.s32.totalorder %s54, %s55
      %p64 = scmp.eq.s32.totalorder %s23, 0
      %p65 = por %p63, %p64
      %p66 = scmp.ne.s32.totalorder %s54, %s55
      %p67 = scmp.eq.s32.totalorder %s24, 1
      %p68 = por %p66, %p67
      %p70 = scmp.ne.s32.totalorder %s55, %s69
      %p71 = scmp.eq.s32.totalorder %s24, 0
      %p72 = por %p70, %p71
      %s74 = sadd.s32 %s73, 1
      %p77 = scmp.eq.s32.totalorder %s18, 1
      %p78 = scmp.ne.s32.totalorder %s73, %s75
      %p79 = scmp.eq.s32.totalorder %s18, 0
      %p80 = por %p78, %p79
      %p81 = scmp.ne.s32.totalorder %s73, %s75
      %p82 = scmp.eq.s32.totalorder %s23, 1
      %p83 = por %p81, %p82
      %p84 = scmp.ne.s32.totalorder %s75, %s76
      %p85 = scmp.eq.s32.totalorder %s23, 0
      %p86 = por %p84, %p85
      %p87 = scmp.ne.s32.totalorder %s75, %s76
      %p88 = scmp.eq.s32.totalorder %s24, 1
      %p89 = por %p87, %p88
      %p91 = scmp.ne.s32.totalorder %s76, %s90
      %p92 = scmp.eq.s32.totalorder %s24, 0
      %p93 = por %p91, %p92
      %s95 = sadd.s32 %s94, 1
      %p98 = scmp.eq.s32.totalorder %s18, 1
      %p99 = scmp.ne.s32.totalorder %s94, %s96
      %p100 = scmp.eq.s32.totalorder %s18, 0
      %p101 = por %p99, %p100
      %p102 = scmp.ne.s32.totalorder %s94, %s96
      %p103 = scmp.eq.s32.totalorder %s23, 1
      %p104 = por %p102, %p103
      %p105 = scmp.ne.s32.totalorder %s96, %s97
      %p106 = scmp.eq.s32.totalorder %s23, 0
      %p107 = por %p105, %p106
      %p108 = scmp.ne.s32.totalorder %s96, %s97
      %p109 = scmp.eq.s32.totalorder %s24, 1
      %p110 = por %p108, %p109
      %p112 = scmp.ne.s32.totalorder %s97, %s111
      %p113 = scmp.eq.s32.totalorder %s24, 0
      %p114 = por %p112, %p113
      %s115 = ssub.s32 %s18, %s25
      %p116 = scmp.eq.s32.totalorder %s115, 0
      %s118 = sadd.s32 %s117, 1
      %s119 = scalar_select %p116, %s117, %s118
      %p122 = pneg %p116
      %p123 = scmp.eq.s32.totalorder %s18, 1
      %p124 = por %p122, %p123
      %p125 = scmp.ne.s32.totalorder %s117, %s120
      %p126 = scmp.eq.s32.totalorder %s18, 0
      %p127 = por %p125, %p126
      %p128 = scmp.ne.s32.totalorder %s117, %s120
      %p129 = scmp.eq.s32.totalorder %s23, 1
      %p130 = por %p128, %p129
      %p131 = scmp.ne.s32.totalorder %s120, %s121
      %p132 = scmp.eq.s32.totalorder %s23, 0
      %p133 = por %p131, %p132
      %p134 = scmp.ne.s32.totalorder %s120, %s121
      %p135 = scmp.eq.s32.totalorder %s24, 1
      %p136 = por %p134, %p135
      %p138 = scmp.ne.s32.totalorder %s121, %s137
      %p139 = scmp.eq.s32.totalorder %s24, 0
      %p140 = por %p138, %p139
      %p141 = scmp.le.s32.totalorder 1, %s18
      %p142 = scmp.lt.s32.totalorder %s18, 3
      %p143 = pnand %p141, %p142
      %p144 = pneg %p143
      // Predicated region
      $region9: #{tpu_custom_call.1} parent=5 // pred_check
        _
      $region10: #{tpu_custom_call.1} parent=5 // pred_check_branch
        %146 = sbr.rel (%p143) target = $region12
      $region11: #{tpu_custom_call.1} parent=5 // pred_region
        %s147 = ssub.s32 %s18, 1
        // Predicated region
        $region13: #{tpu_custom_call.1} parent=11 // pred_check
          %p148 = pneg %p65
        $region14: #{tpu_custom_call.1} parent=11 // pred_check_branch
          %150 = sbr.rel (%p148) target = $region16
        $region15: #{tpu_custom_call.1} parent=11 // pred_region
          %s152 = ssub.s32 16, 16
          %153 = vsyncadd [#allocation5], %s152
          %s155 = sshll.u32 %s1, 4
          %s156 = int_to_ptr.vmem [resolvable:$true] %s155
          %158 = dma.vmem_to_smem %s156, 16, [#allocation6], [#allocation5]
        $region16: #{tpu_custom_call.1} parent=11 // pred_fallthru
          _
        // Predicated region
        $region17: #{tpu_custom_call.1} parent=11 // pred_check
          %p159 = pneg %p86
        $region18: #{tpu_custom_call.1} parent=11 // pred_check_branch
          %161 = sbr.rel (%p159) target = $region20
        $region19: #{tpu_custom_call.1} parent=11 // pred_region
          %s163 = ssub.s32 16, 16
          %164 = vsyncadd [#allocation8], %s163
          %s166 = sshll.u32 %s2, 4
          %s167 = int_to_ptr.vmem [resolvable:$true] %s166
          %169 = dma.vmem_to_smem %s167, 16, [#allocation7], [#allocation8]
        $region20: #{tpu_custom_call.1} parent=11 // pred_fallthru
          _
        // Predicated region
        $region21: #{tpu_custom_call.1} parent=11 // pred_check
          %p170 = pneg %p107
        $region22: #{tpu_custom_call.1} parent=11 // pred_check_branch
          %172 = sbr.rel (%p170) target = $region24
        $region23: #{tpu_custom_call.1} parent=11 // pred_region
          %s174 = ssub.s32 16, 16
          %175 = vsyncadd [#allocation8], %s174
          %s177 = sshll.u32 %s3, 4
          %s178 = int_to_ptr.vmem [resolvable:$true] %s177
          %180 = dma.vmem_to_smem %s178, 16, [#allocation9], [#allocation8]
        $region24: #{tpu_custom_call.1} parent=11 // pred_fallthru
          _
      $region12: #{tpu_custom_call.1} parent=5 // pred_fallthru
        _
      %p181 = scmp.lt.s32.totalorder %s18, 2
      // Predicated region
      $region25: #{tpu_custom_call.1} parent=5 // pred_check
        %p182 = pneg %p181
      $region26: #{tpu_custom_call.1} parent=5 // pred_check_branch
        %184 = sbr.rel (%p182) target = $region28
      $region27: #{tpu_custom_call.1} parent=5 // pred_region
        // Predicated region
        $region29: #{tpu_custom_call.1} parent=27 // pred_check
          %p185 = pneg %p38
        $region30: #{tpu_custom_call.1} parent=27 // pred_check_branch
          %187 = sbr.rel (%p185) target = $region32
        $region31: #{tpu_custom_call.1} parent=27 // pred_region
          %s188 = sand.u32 %s28, 1
          %s189 = scalar_lea.sflag [#allocation3], %s188
          %s190 = sand.u32 %s28, 1
          %s191 = smul.addr %s190, 8
          %s192 = scalar_lea.vmem [#allocation2], %s191
          %s194 = ssub.s32 128, 128
          %195 = vsyncadd %s189, %s194
          %s196 = smul.addr %s18, 2
          %s197 = smul.addr %s196, 64
          %s198 = scalar_lea.hbm %s0, %s197
          %s200 = sshll.u32 %s192, 4
          %s201 = int_to_ptr.vmem [resolvable:$true] %s200
          %203 = dma.hbm_to_vmem [thread:$0]  %s198, 128, %s201, %s189
        $region32: #{tpu_custom_call.1} parent=27 // pred_fallthru
          _
      $region28: #{tpu_custom_call.1} parent=5 // pred_fallthru
        _
      %p204 = scmp.le.s32.totalorder 1, %s18
      %p205 = scmp.lt.s32.totalorder %s18, 3
      %p206 = pnand %p204, %p205
      %p207 = pneg %p206
      // Predicated region
      $region33: #{tpu_custom_call.1} parent=5 // pred_check
        _
      $region34: #{tpu_custom_call.1} parent=5 // pred_check_branch
        %209 = sbr.rel (%p206) target = $region36
      $region35: #{tpu_custom_call.1} parent=5 // pred_region
        %s210 = ssub.s32 %s18, 1
        %s211 = sand.u32 %s31, 1
        %s212 = scalar_lea.sflag [#allocation3], %s211
        %s213 = sand.u32 %s31, 1
        %s214 = smul.addr %s213, 8
        %s215 = scalar_lea.vmem [#allocation2], %s214
        // Predicated region
        $region37: #{tpu_custom_call.1} parent=35 // pred_check
          %p216 = pneg %p44
        $region38: #{tpu_custom_call.1} parent=35 // pred_check_branch
          %218 = sbr.rel (%p216) target = $region40
        $region39: #{tpu_custom_call.1} parent=35 // pred_region
          %219 = dma.done %s212, 128
        $region40: #{tpu_custom_call.1} parent=35 // pred_fallthru
          _
        // Predicated region
        $region41: #{tpu_custom_call.1} parent=35 // pred_check
          %p220 = pneg %p65
        $region42: #{tpu_custom_call.1} parent=35 // pred_check_branch
          %222 = sbr.rel (%p220) target = $region44
        $region43: #{tpu_custom_call.1} parent=35 // pred_region
          %223 = dma.done [#allocation5], 16
        $region44: #{tpu_custom_call.1} parent=35 // pred_fallthru
          _
        // Predicated region
        $region45: #{tpu_custom_call.1} parent=35 // pred_check
          %p224 = pneg %p86
        $region46: #{tpu_custom_call.1} parent=35 // pred_check_branch
          %226 = sbr.rel (%p224) target = $region48
        $region47: #{tpu_custom_call.1} parent=35 // pred_region
          %227 = dma.done [#allocation8], 16
        $region48: #{tpu_custom_call.1} parent=35 // pred_fallthru
          _
        // Predicated region
        $region49: #{tpu_custom_call.1} parent=35 // pred_check
          %p228 = pneg %p107
        $region50: #{tpu_custom_call.1} parent=35 // pred_check_branch
          %230 = sbr.rel (%p228) target = $region52
        $region51: #{tpu_custom_call.1} parent=35 // pred_region
          %231 = dma.done [#allocation8], 16
        $region52: #{tpu_custom_call.1} parent=35 // pred_fallthru
          _
        %232 = sfence
        %s233 = sand.u32 %s31, 1
        %s234 = scalar_lea.sflag [#allocation3], %s233
        %s235 = sand.u32 %s31, 1
        %s236 = smul.addr %s235, 8
        %s237 = scalar_lea.vmem [#allocation2], %s236
        %p238 = pneg %p44
        %p239 = pneg %p41
        %p240 = pneg %p65
        %p241 = pneg %p62
        %p242 = pneg %p86
        %p243 = pneg %p83
        %p244 = pneg %p107
        %p245 = pneg %p104
        %p246 = pneg %p133
        %p247 = pneg %p130
        %s248 = sand.u32 %s120, 1
        %s249 = scalar_lea.sflag [#allocation4], %s248
        %s250 = sand.u32 %s120, 1
        %s251 = smul.addr %s250, 8
        %s252 = scalar_lea.vmem [#allocation10], %s251
        %v253 = vld [vmem:[%s215] sm:$0xff]
        %v254 = vmax.f32 %v253, 0.0
        %s255 = sld [smem:[#allocation6]]
        %v256 = vstv %s255
        %v257 = vmul.f32 %v254, %v256
        %s258 = sld [smem:[#allocation6 + $0x2]]
        %v259 = vstv %s258
        %v260 = vmul.f32 %v254, %v259
        %v262 = vrot.slane %v260, 5
        %v263 = vrot.slane %v262, 4
        %v265 = vadd.f32 %v257, %v263
        %s266 = sld [smem:[#allocation6 + $0x4]]
        %v267 = vstv %s266
        %v268 = vmul.f32 %v254, %v267
        %v270 = vrot.slane %v268, 6
        %v271 = vrot.slane %v270, 4
        %v273 = vadd.f32 %v265, %v271
        %s274 = sld [smem:[#allocation6 + $0x6]]
        %v275 = vstv %s274
        %v276 = vmul.f32 %v254, %v275
        %v278 = vrot.slane %v276, 7
        %v279 = vrot.slane %v278, 4
        %v281 = vadd.f32 %v273, %v279
        %s282 = sld [smem:[#allocation6 + $0x1]]
        %v283 = vstv %s282
        %v284 = vmul.f32 %v254, %v283
        %s285 = sld [smem:[#allocation6 + $0x3]]
        %v286 = vstv %s285
        %v287 = vmul.f32 %v254, %v286
        %v289 = vrot.slane %v287, 5
        %v290 = vrot.slane %v289, 4
        %v292 = vadd.f32 %v284, %v290
        %s293 = sld [smem:[#allocation6 + $0x5]]
        %v294 = vstv %s293
        %v295 = vmul.f32 %v254, %v294
        %v297 = vrot.slane %v295, 6
        %v298 = vrot.slane %v297, 4
        %v300 = vadd.f32 %v292, %v298
        %s301 = sld [smem:[#allocation6 + $0x7]]
        %v302 = vstv %s301
        %v303 = vmul.f32 %v254, %v302
        %v305 = vrot.slane %v303, 7
        %v306 = vrot.slane %v305, 4
        %v308 = vadd.f32 %v300, %v306
        %v310 = vlaneseq
        %v311 = vshrl.u32 %v310, 7
        %v312 = vsub.s32 0, %v311
        %v313 = vrot.slane %v281, %v312
        %v314 = vlaneseq
        %v315 = vshrl.u32 %v314, 7
        %v316 = vsub.s32 4, %v315
        %v317 = vrot.slane %v281, %v316
        %v321 = vlaneseq
        %v322 = vshrl.u32 %v321, 7
        %v323 = vsub.s32 0, %v322
        %v324 = vrot.slane %v308, %v323
        %v325 = vlaneseq
        %v326 = vshrl.u32 %v325, 7
        %v327 = vsub.s32 4, %v326
        %v328 = vrot.slane %v308, %v327
        %vm331 = vcmask 1040384
        %v332 = vsel %vm331, %v313, %v324
        %v333 = vsel %vm331, %v317, %v328
        %v334 = vlaneseq
        %v335 = vand.u32 %v334, 127
        %v336 = vadd.s32 %v335, 128
        %vm337 = vcmp.lt.s32.totalorder %v335, 0
        %v338 = vsub.s32 0, %v335
        %v339 = vsel %vm337, %v338, %v335
        %v340 = vshrl.u32 %v339, 4
        %v341 = vand.u32 %v339, 15
        %v342 = vsub.s32 0, %v341
        %v343 = vsel %vm337, %v342, %v341
        %vm344 = vcmp.lt.s32.totalorder %v336, 0
        %v345 = vsub.s32 0, %v336
        %v346 = vsel %vm344, %v345, %v336
        %v347 = vshrl.u32 %v346, 4
        %v348 = vand.u32 %v346, 15
        %v349 = vsub.s32 0, %v348
        %v350 = vsel %vm344, %v349, %v348
        %vm351 = vcmp.ne.s32.totalorder %v343, 0
        %vm352 = vcmp.ne.s32.totalorder %v350, 0
        %vm353 = vcmp.lt.s32.totalorder %v343, 0
        %vm354 = vcmp.lt.s32.totalorder %v350, 0
        %vm355 = vmand %vm353, %vm351
        %vm356 = vmand %vm354, %vm352
        %v357 = vadd.s32 %v343, 16
        %v358 = vadd.s32 %v350, 16
        %v359 = vsel %vm355, %v357, %v343
        %v360 = vsel %vm356, %v358, %v350
        %v361 = vadd.s32 %v359, 4294967295
        %v362 = vadd.s32 %v360, 4294967295
        %vm363 = vcmp.ge.s32.totalorder %v361, 0
        %vm364 = vcmp.ge.s32.totalorder %v362, 0
        %vm365 = vcmp.lt.s32.totalorder %v361, 16
        %vm366 = vcmp.lt.s32.totalorder %v362, 16
        %vm367 = vmand %vm363, %vm365
        %vm368 = vmand %vm364, %vm366
        %v369 = vadd.s32 %v359, 1
        %v370 = vadd.s32 %v360, 1
        %vm371 = vcmp.ge.s32.totalorder %v369, 0
        %vm372 = vcmp.ge.s32.totalorder %v370, 0
        %vm373 = vcmp.lt.s32.totalorder %v369, 16
        %vm374 = vcmp.lt.s32.totalorder %v370, 16
        %vm375 = vmand %vm371, %vm373
        %vm376 = vmand %vm372, %vm374
        %379 = vrot.lane.b32.xlu0 %v332, 17
        %v380 = vpop.permute.xlu0 %379
        %381 = vrot.lane.b32.xlu0 %v333, 17
        %v382 = vpop.permute.xlu0 %381
        %vm383 = vcmask 138240
        %v384 = vsel %vm383, %v380, %v382
        %v388 = vsel %vm383, 0.0, %v380
        %v389 = vsel %vm383, %v382, 0.0
        %v390 = vsel %vm367, %v388, 0.0
        %v391 = vsel %vm368, %v384, 0.0
        %s392 = sld [smem:[#allocation7]]
        %v393 = vstv %s392
        %v394 = vmul.f32 %v390, %v393
        %v395 = vmul.f32 %v391, %v393
        %v396 = vadd.f32 %v394, 0.0
        %v397 = vadd.f32 %v395, 0.0
        %s398 = sld [smem:[#allocation7 + $0x1]]
        %v399 = vstv %s398
        %v400 = vmul.f32 %v390, %v399
        %v401 = vmul.f32 %v391, %v399
        %v402 = vadd.f32 %v400, 0.0
        %v403 = vadd.f32 %v401, 0.0
        %s404 = sld [smem:[#allocation7 + $0x2]]
        %v405 = vstv %s404
        %v406 = vmul.f32 %v388, %v405
        %v407 = vmul.f32 %v384, %v405
        %v408 = vmul.f32 %v389, %v405
        %412 = vrot.lane.b32.xlu0 %v406, 127
        %v413 = vpop.permute.xlu0 %412
        %414 = vrot.lane.b32.xlu0 %v407, 127
        %v415 = vpop.permute.xlu0 %414
        %416 = vrot.lane.b32.xlu0 %v408, 127
        %v417 = vpop.permute.xlu0 %416
        %vm418 = vcmask 1039360
        %v419 = vsel %vm418, %v413, %v415
        %v420 = vsel %vm418, %v415, %v417
        %v423 = vadd.f32 %v396, %v419
        %v424 = vadd.f32 %v397, %v420
        %s425 = sld [smem:[#allocation7 + $0x3]]
        %v426 = vstv %s425
        %v427 = vmul.f32 %v388, %v426
        %v428 = vmul.f32 %v384, %v426
        %v429 = vmul.f32 %v389, %v426
        %433 = vrot.lane.b32.xlu0 %v427, 127
        %v434 = vpop.permute.xlu0 %433
        %435 = vrot.lane.b32.xlu0 %v428, 127
        %v436 = vpop.permute.xlu0 %435
        %437 = vrot.lane.b32.xlu0 %v429, 127
        %v438 = vpop.permute.xlu0 %437
        %v439 = vsel %vm418, %v434, %v436
        %v440 = vsel %vm418, %v436, %v438
        %v443 = vadd.f32 %v402, %v439
        %v444 = vadd.f32 %v403, %v440
        %447 = vrot.lane.b32.xlu0 %v388, 126
        %v448 = vpop.permute.xlu0 %447
        %449 = vrot.lane.b32.xlu0 %v384, 126
        %v450 = vpop.permute.xlu0 %449
        %451 = vrot.lane.b32.xlu0 %v389, 126
        %v452 = vpop.permute.xlu0 %451
        %vm453 = vcmask 1031168
        %v454 = vsel %vm453, %v448, %v450
        %v455 = vsel %vm453, %v450, %v452
        %v458 = vsel %vm375, %v454, 0.0
        %v459 = vsel %vm376, %v455, 0.0
        %s460 = sld [smem:[#allocation7 + $0x4]]
        %v461 = vstv %s460
        %v462 = vmul.f32 %v458, %v461
        %v463 = vmul.f32 %v459, %v461
        %v464 = vadd.f32 %v423, %v462
        %v465 = vadd.f32 %v424, %v463
        %s466 = sld [smem:[#allocation7 + $0x5]]
        %v467 = vstv %s466
        %v468 = vmul.f32 %v458, %v467
        %v469 = vmul.f32 %v459, %v467
        %v470 = vadd.f32 %v443, %v468
        %v471 = vadd.f32 %v444, %v469
        %472 = vrot.lane.b32.xlu0 %v388, 112
        %v473 = vpop.permute.xlu0 %472
        %474 = vrot.lane.b32.xlu0 %v384, 112
        %v475 = vpop.permute.xlu0 %474
        %476 = vrot.lane.b32.xlu0 %v389, 112
        %v477 = vpop.permute.xlu0 %476
        %vm478 = vcmask 916480
        %v479 = vsel %vm478, %v473, %v475
        %v480 = vsel %vm478, %v475, %v477
        %v483 = vsel %vm367, %v479, 0.0
        %v484 = vsel %vm368, %v480, 0.0
        %s485 = sld [smem:[#allocation7 + $0x6]]
        %v486 = vstv %s485
        %v487 = vmul.f32 %v483, %v486
        %v488 = vmul.f32 %v484, %v486
        %v489 = vadd.f32 %v464, %v487
        %v490 = vadd.f32 %v465, %v488
        %s491 = sld [smem:[#allocation7 + $0x7]]
        %v492 = vstv %s491
        %v493 = vmul.f32 %v483, %v492
        %v494 = vmul.f32 %v484, %v492
        %v495 = vadd.f32 %v470, %v493
        %v496 = vadd.f32 %v471, %v494
        %s497 = sld [smem:[#allocation7 + $0x8]]
        %v498 = vstv %s497
        %v499 = vmul.f32 %v388, %v498
        %v500 = vmul.f32 %v384, %v498
        %v501 = vmul.f32 %v389, %v498
        %505 = vrot.lane.b32.xlu0 %v499, 111
        %v506 = vpop.permute.xlu0 %505
        %507 = vrot.lane.b32.xlu0 %v500, 111
        %v508 = vpop.permute.xlu0 %507
        %509 = vrot.lane.b32.xlu0 %v501, 111
        %v510 = vpop.permute.xlu0 %509
        %vm511 = vcmask 908288
        %v512 = vsel %vm511, %v506, %v508
        %v513 = vsel %vm511, %v508, %v510
        %v516 = vadd.f32 %v489, %v512
        %v517 = vadd.f32 %v490, %v513
        %s518 = sld [smem:[#allocation7 + $0x9]]
        %v519 = vstv %s518
        %v520 = vmul.f32 %v388, %v519
        %v521 = vmul.f32 %v384, %v519
        %v522 = vmul.f32 %v389, %v519
        %526 = vrot.lane.b32.xlu0 %v520, 111
        %v527 = vpop.permute.xlu0 %526
        %528 = vrot.lane.b32.xlu0 %v521, 111
        %v529 = vpop.permute.xlu0 %528
        %530 = vrot.lane.b32.xlu0 %v522, 111
        %v531 = vpop.permute.xlu0 %530
        %v532 = vsel %vm511, %v527, %v529
        %v533 = vsel %vm511, %v529, %v531
        %v536 = vadd.f32 %v495, %v532
        %v537 = vadd.f32 %v496, %v533
        %538 = vrot.lane.b32.xlu0 %v388, 110
        %v539 = vpop.permute.xlu0 %538
        %540 = vrot.lane.b32.xlu0 %v384, 110
        %v541 = vpop.permute.xlu0 %540
        %542 = vrot.lane.b32.xlu0 %v389, 110
        %v543 = vpop.permute.xlu0 %542
        %vm544 = vcmask 900096
        %v545 = vsel %vm544, %v539, %v541
        %v546 = vsel %vm544, %v541, %v543
        %v549 = vsel %vm375, %v545, 0.0
        %v550 = vsel %vm376, %v546, 0.0
        %s551 = sld [smem:[#allocation7 + $0xa]]
        %v552 = vstv %s551
        %v553 = vmul.f32 %v549, %v552
        %v554 = vmul.f32 %v550, %v552
        %v555 = vadd.f32 %v516, %v553
        %v556 = vadd.f32 %v517, %v554
        %s557 = sld [smem:[#allocation7 + $0xb]]
        %v558 = vstv %s557
        %v559 = vmul.f32 %v549, %v558
        %v560 = vmul.f32 %v550, %v558
        %v561 = vadd.f32 %v536, %v559
        %v562 = vadd.f32 %v537, %v560
        %563 = vrot.lane.b32.xlu0 %v388, 96
        %v564 = vpop.permute.xlu0 %563
        %565 = vrot.lane.b32.xlu0 %v384, 96
        %v566 = vpop.permute.xlu0 %565
        %567 = vrot.lane.b32.xlu0 %v389, 96
        %v568 = vpop.permute.xlu0 %567
        %vm569 = vcmask 785408
        %v570 = vsel %vm569, %v564, %v566
        %v571 = vsel %vm569, %v566, %v568
        %v574 = vsel %vm367, %v570, 0.0
        %v575 = vsel %vm368, %v571, 0.0
        %s576 = sld [smem:[#allocation7 + $0xc]]
        %v577 = vstv %s576
        %v578 = vmul.f32 %v574, %v577
        %v579 = vmul.f32 %v575, %v577
        %v580 = vadd.f32 %v555, %v578
        %v581 = vadd.f32 %v556, %v579
        %s582 = sld [smem:[#allocation7 + $0xd]]
        %v583 = vstv %s582
        %v584 = vmul.f32 %v574, %v583
        %v585 = vmul.f32 %v575, %v583
        %v586 = vadd.f32 %v561, %v584
        %v587 = vadd.f32 %v562, %v585
        %s588 = sld [smem:[#allocation7 + $0xe]]
        %v589 = vstv %s588
        %v590 = vmul.f32 %v388, %v589
        %v591 = vmul.f32 %v384, %v589
        %v592 = vmul.f32 %v389, %v589
        %596 = vrot.lane.b32.xlu0 %v590, 95
        %v597 = vpop.permute.xlu0 %596
        %598 = vrot.lane.b32.xlu0 %v591, 95
        %v599 = vpop.permute.xlu0 %598
        %600 = vrot.lane.b32.xlu0 %v592, 95
        %v601 = vpop.permute.xlu0 %600
        %vm602 = vcmask 777216
        %v603 = vsel %vm602, %v597, %v599
        %v604 = vsel %vm602, %v599, %v601
        %v607 = vadd.f32 %v580, %v603
        %v608 = vadd.f32 %v581, %v604
        %s609 = sld [smem:[#allocation7 + $0xf]]
        %v610 = vstv %s609
        %v611 = vmul.f32 %v388, %v610
        %v612 = vmul.f32 %v384, %v610
        %v613 = vmul.f32 %v389, %v610
        %617 = vrot.lane.b32.xlu0 %v611, 95
        %v618 = vpop.permute.xlu0 %617
        %619 = vrot.lane.b32.xlu0 %v612, 95
        %v620 = vpop.permute.xlu0 %619
        %621 = vrot.lane.b32.xlu0 %v613, 95
        %v622 = vpop.permute.xlu0 %621
        %v623 = vsel %vm602, %v618, %v620
        %v624 = vsel %vm602, %v620, %v622
        %v627 = vadd.f32 %v586, %v623
        %v628 = vadd.f32 %v587, %v624
        %629 = vrot.lane.b32.xlu0 %v388, 94
        %v630 = vpop.permute.xlu0 %629
        %631 = vrot.lane.b32.xlu0 %v384, 94
        %v632 = vpop.permute.xlu0 %631
        %633 = vrot.lane.b32.xlu0 %v389, 94
        %v634 = vpop.permute.xlu0 %633
        %vm635 = vcmask 769024
        %v636 = vsel %vm635, %v630, %v632
        %v637 = vsel %vm635, %v632, %v634
        %v640 = vsel %vm375, %v636, 0.0
        %v641 = vsel %vm376, %v637, 0.0
        %s642 = sld [smem:[#allocation7 + $0x10]]
        %v643 = vstv %s642
        %v644 = vmul.f32 %v640, %v643
        %v645 = vmul.f32 %v641, %v643
        %v646 = vadd.f32 %v607, %v644
        %v647 = vadd.f32 %v608, %v645
        %s648 = sld [smem:[#allocation7 + $0x11]]
        %v649 = vstv %s648
        %v650 = vmul.f32 %v640, %v649
        %v651 = vmul.f32 %v641, %v649
        %v652 = vadd.f32 %v627, %v650
        %v653 = vadd.f32 %v628, %v651
        %v654 = vsel %vm331, %v646, %v652
        %v655 = vsel %vm331, %v647, %v653
        %s656 = sld [smem:[#allocation9]]
        %v657 = vstv %s656
        %v658 = vmul.f32 %v654, %v657
        %v659 = vmul.f32 %v655, %v657
        %s660 = sld [smem:[#allocation9 + $0x4]]
        %v661 = vstv %s660
        %v662 = vmul.f32 %v654, %v661
        %v663 = vmul.f32 %v655, %v661
        %v666 = vrot.slane %v662, 1
        %v667 = vrot.slane %v663, 1
        %v670 = vadd.f32 %v658, %v666
        %v671 = vadd.f32 %v659, %v667
        %s672 = sld [smem:[#allocation9 + $0x1]]
        %v673 = vstv %s672
        %v674 = vmul.f32 %v654, %v673
        %v675 = vmul.f32 %v655, %v673
        %s676 = sld [smem:[#allocation9 + $0x5]]
        %v677 = vstv %s676
        %v678 = vmul.f32 %v654, %v677
        %v679 = vmul.f32 %v655, %v677
        %v682 = vrot.slane %v678, 1
        %v683 = vrot.slane %v679, 1
        %v686 = vadd.f32 %v674, %v682
        %v687 = vadd.f32 %v675, %v683
        %s688 = sld [smem:[#allocation9 + $0x2]]
        %v689 = vstv %s688
        %v690 = vmul.f32 %v654, %v689
        %v691 = vmul.f32 %v655, %v689
        %s692 = sld [smem:[#allocation9 + $0x6]]
        %v693 = vstv %s692
        %v694 = vmul.f32 %v654, %v693
        %v695 = vmul.f32 %v655, %v693
        %v698 = vrot.slane %v694, 1
        %v699 = vrot.slane %v695, 1
        %v702 = vadd.f32 %v690, %v698
        %v703 = vadd.f32 %v691, %v699
        %s704 = sld [smem:[#allocation9 + $0x3]]
        %v705 = vstv %s704
        %v706 = vmul.f32 %v654, %v705
        %v707 = vmul.f32 %v655, %v705
        %s708 = sld [smem:[#allocation9 + $0x7]]
        %v709 = vstv %s708
        %v710 = vmul.f32 %v654, %v709
        %v711 = vmul.f32 %v655, %v709
        %v714 = vrot.slane %v710, 1
        %v715 = vrot.slane %v711, 1
        %v718 = vadd.f32 %v706, %v714
        %v719 = vadd.f32 %v707, %v715
        %v722 = vrot.slane %v686, 7
        %v723 = vrot.slane %v687, 7
        %v728 = vrot.slane %v702, 6
        %v729 = vrot.slane %v703, 6
        %v734 = vrot.slane %v718, 5
        %v735 = vrot.slane %v719, 5
        %v738 = vsel %vm331, %v670, %v722
        %v739 = vsel %vm331, %v671, %v723
        %vm740 = vcmask 1041408
        %v741 = vsel %vm740, %v738, %v728
        %v742 = vsel %vm740, %v739, %v729
        %vm743 = vcmask 1042432
        %v744 = vsel %vm743, %v741, %v734
        %v745 = vsel %vm743, %v742, %v735
        %v748 = vcombine.low %v744, %v745
        %750 = vst [vmem:[%s252] sm:$0xff] %v748
        %s751 = sand.u32 %s120, 1
        %s752 = scalar_lea.sflag [#allocation4], %s751
        %s753 = sand.u32 %s120, 1
        %s754 = smul.addr %s753, 8
        %s755 = scalar_lea.vmem [#allocation10], %s754
        // Predicated region
        $region53: #{tpu_custom_call.1} parent=35 // pred_check
          %p756 = pneg %p130
        $region54: #{tpu_custom_call.1} parent=35 // pred_check_branch
          %758 = sbr.rel (%p756) target = $region56
        $region55: #{tpu_custom_call.1} parent=35 // pred_region
          %s760 = ssub.s32 128, 128
          %761 = vsyncadd %s752, %s760
          %s762 = smul.addr %s23, 2
          %s763 = smul.addr %s762, 64
          %s764 = scalar_lea.hbm %s4, %s763
          %s766 = sshll.u32 %s755, 4
          %s767 = int_to_ptr.vmem [resolvable:$true] %s766
          %769 = dma.vmem_to_hbm [thread:$0]  %s767, 128, %s764, %s752
        $region56: #{tpu_custom_call.1} parent=35 // pred_fallthru
          _
      $region36: #{tpu_custom_call.1} parent=5 // pred_fallthru
        _
      %p770 = scmp.le.s32.totalorder 2, %s18
      // Predicated region
      $region57: #{tpu_custom_call.1} parent=5 // pred_check
        %p771 = pneg %p770
      $region58: #{tpu_custom_call.1} parent=5 // pred_check_branch
        %773 = sbr.rel (%p771) target = $region60
      $region59: #{tpu_custom_call.1} parent=5 // pred_region
        %s774 = ssub.s32 %s18, 2
        // Predicated region
        $region61: #{tpu_custom_call.1} parent=59 // pred_check
          %p775 = pneg %p136
        $region62: #{tpu_custom_call.1} parent=59 // pred_check_branch
          %777 = sbr.rel (%p775) target = $region64
        $region63: #{tpu_custom_call.1} parent=59 // pred_region
          %s778 = sand.u32 %s121, 1
          %s779 = scalar_lea.sflag [#allocation4], %s778
          %s780 = sand.u32 %s121, 1
          %s781 = smul.addr %s780, 8
          %s782 = scalar_lea.vmem [#allocation10], %s781
          %783 = dma.done %s779, 128
        $region64: #{tpu_custom_call.1} parent=59 // pred_fallthru
          _
      $region60: #{tpu_custom_call.1} parent=5 // pred_fallthru
        _
    $region6: #{tpu_custom_call.1} parent=1 // loop_footer
      %s22 = sadd.s32 1, %s18
    $region7: #{tpu_custom_call.1} parent=1 // loop_footer_branch
      %17 = sbr.rel target = $region3
    $region8: #{tpu_custom_call.1} parent=1 // loop_exit
      _
    %784 = vsyncpa [#allocation3], 1
    %s785 = scalar_lea.sflag [#allocation3], 1
    %786 = vsyncpa %s785, 1
    %787 = vsyncpa [#allocation4], 1
    %s788 = scalar_lea.sflag [#allocation4], 1
    %789 = vsyncpa %s788, 1
    %790 = vsyncpa [#allocation5], 1
    %s791 = scalar_lea.sflag [#allocation5], 1
    %792 = vsyncpa %s791, 1
    %793 = vsyncpa [#allocation8], 1

</llo_original>
